<compile_context>
chip_gen: v6e
topology: v6e:2x2x1
jax: 0.10.0
libtpu: 0.0.40
codegen_flags: <defaults>
</compile_context>

<pallas_src>
import functools

import jax
import jax.numpy as jnp
from jax.experimental import pallas as pl
from jax.experimental.pallas import tpu as pltpu


def identity(x: jax.Array) -> jax.Array:
    """Module-faithful forward: nn.Identity is a no-op; cheapest is to return x."""
    return x


_CHUNK_BYTES_THRESHOLD = 8 * 1024 * 1024  # only bother chunking >= 8 MiB copies
_MAX_CHUNKS = 4


def _identity_dma_kernel(x_ref, o_ref, sem, *, n_chunks, chunk_rows):
    """Copy x_ref -> o_ref entirely with async DMA (no VMEM round trip)."""
    if n_chunks == 1:
        cp = pltpu.make_async_copy(x_ref, o_ref, sem.at[0])
        cp.start()
        cp.wait()
    else:
        # Issue all chunk DMAs back-to-back so they overlap, then wait on each.
        copies = []
        for c in range(n_chunks):
            cp = pltpu.make_async_copy(
                x_ref.at[pl.ds(c * chunk_rows, chunk_rows)],
                o_ref.at[pl.ds(c * chunk_rows, chunk_rows)],
                sem.at[c],
            )
            cp.start()
            copies.append(cp)
        for cp in copies:
            cp.wait()


def identity_pallas(x: jax.Array) -> jax.Array:
    """Identity through a Pallas custom-call boundary.

    Materializes a fresh output buffer via one (or a few overlapped) direct
    HBM->HBM async DMAs.  No grid, no VMEM streaming, no tile-size or
    vmem_limit concerns on any TPU generation.
    """
    if x.size == 0:
        return jnp.copy(x)  # nothing to DMA; still return a fresh buffer

    # Work on a >=1-D view so chunking along axis 0 is well-defined.
    x_view = x.reshape(1) if x.ndim == 0 else x

    lead = x_view.shape[0]
    total_bytes = x.size * x.dtype.itemsize
    n_chunks = 1
    if total_bytes >= _CHUNK_BYTES_THRESHOLD:
        for cand in range(_MAX_CHUNKS, 1, -1):
            if lead % cand == 0:
                n_chunks = cand
                break
    chunk_rows = lead // n_chunks

    kernel = functools.partial(
        _identity_dma_kernel, n_chunks=n_chunks, chunk_rows=chunk_rows
    )

    out = pl.pallas_call(
        kernel,
        out_shape=jax.ShapeDtypeStruct(x_view.shape, x.dtype),
        in_specs=[pl.BlockSpec(memory_space=pl.ANY)],
        out_specs=pl.BlockSpec(memory_space=pl.ANY),
        scratch_shapes=[pltpu.SemaphoreType.DMA((n_chunks,))],
    )(x_view)
    return out.reshape(x.shape)


if __name__ == "__main__":
    key = jax.random.PRNGKey(0)
    # NCHW input consistent with the surrounding (conv-style) code in the source file.
    x = jax.random.normal(key, (2, 4, 16, 16), dtype=jnp.float32)

    # True zero-cost identity (module-faithful forward).
    y_ref = identity(x)
    assert y_ref is x

    # Pallas kernel: materialized identity via direct HBM->HBM DMA.
    y = identity_pallas(x)
    jax.block_until_ready(y)
    assert y.shape == x.shape and y.dtype == x.dtype
    assert bool(jnp.all(y == x))

    print("KERNEL_OK")
</pallas_src>

<mosaic_0001>
module attributes {stable_mosaic.version = 11 : i64} {
  func.func @_identity_dma_kernel(%arg0: memref<2x4x16x16xf32, #tpu.memory_space<any>>, %arg1: memref<2x4x16x16xf32, #tpu.memory_space<any>>, %arg2: memref<1x!tpu.dma_semaphore, #tpu.memory_space<semaphore_mem>>) attributes {dimension_semantics = [], scalar_prefetch = 0 : i64, scratch_operands = 1 : i64, tpu.core_type = #tpu.core_type<tc>} {
    %c0_i32 = arith.constant 0 : i32
    %0 = tpu.memref_slice %arg2[%c0_i32] : memref<1x!tpu.dma_semaphore, #tpu.memory_space<semaphore_mem>> -> memref<1x!tpu.dma_semaphore, #tpu.memory_space<semaphore_mem>>
    %1 = tpu.memref_squeeze %0 : memref<1x!tpu.dma_semaphore, #tpu.memory_space<semaphore_mem>> -> memref<!tpu.dma_semaphore, #tpu.memory_space<semaphore_mem>>
    tpu.enqueue_dma source(%arg0 : memref<2x4x16x16xf32, #tpu.memory_space<any>>) target(%arg1 : memref<2x4x16x16xf32, #tpu.memory_space<any>>) target_semaphore(%1 : memref<!tpu.dma_semaphore, #tpu.memory_space<semaphore_mem>>)
    %c0_i32_0 = arith.constant 0 : i32
    %2 = tpu.memref_slice %arg2[%c0_i32_0] : memref<1x!tpu.dma_semaphore, #tpu.memory_space<semaphore_mem>> -> memref<1x!tpu.dma_semaphore, #tpu.memory_space<semaphore_mem>>
    %3 = tpu.memref_squeeze %2 : memref<1x!tpu.dma_semaphore, #tpu.memory_space<semaphore_mem>> -> memref<!tpu.dma_semaphore, #tpu.memory_space<semaphore_mem>>
    tpu.wait_dma2 semaphore(%3 : memref<!tpu.dma_semaphore, #tpu.memory_space<semaphore_mem>>) src(%arg0 : memref<2x4x16x16xf32, #tpu.memory_space<any>>) dst(%arg1 : memref<2x4x16x16xf32, #tpu.memory_space<any>>)
    return
  }
}

</mosaic_0001>

<llo_original>
// kernel: tpu_custom_call.1
$region0: #{tpu_custom_call.1}
  #allocation0 [shape = 'u32[]', space=smem, size = 0x4, offset = 0x4, fixed_abs, tag = 'smem constant byte address 0x4 - core index']
  #allocation1 [shape = 'u32[144,128]{1,0:T(1,128)}', space=vmem, size = 0x12000, scoped, tag = 'internal scratch']
  #allocation2 [shape = 's32[1]{0}', space=sflag, size = 0x4, scoped, tag = 'scratch operand']
  #allocation3 [shape = 's32[]', space=sflag, size = 0x4, offset = 0, fixed_abs, tag = 'sflag constant byte address 0x0 - dummy sync flag']
  #allocation4 [shape = 'u32[0]{0}', space=smem, size = 0, offset = 0, fixed_abs, tag = 'smem constant byte address 0x0 - null']
  %s0 = inlined_call_operand.hbm [shape: f32[2,4,16,16], index: 0, kind: input, shape index: {}]
  %s1 = inlined_call_operand.hbm [shape: f32[2,4,16,16], index: 1, kind: output, shape index: {}]
  %s2 = sld [smem:[#allocation0]]
  $region2: #{tpu_custom_call.1} parent=0
    _
  %s4 = ssub.s32 1, %s2
  %s5 = scalar_select 0, %s4, %s2
  %s7 = sshll.u32 1, 14
  %s8 = sxor.u32 4294967295, %s7
  %12 = dma.general %s0, 2048, %s1, [#allocation2], 131072, [#allocation4], 0, 0
  %s13 = smul.u32 2, 4
  %s14 = smul.u32 %s13, 16
  %s15 = smul.u32 %s14, 1
  %s16 = sshll.u32 %s15, 4
  %17 = dma.done [#allocation2], %s16
  %18 = vsyncmov [#allocation2]
  %s19 = vpop.sfrf %18
  %p20 = scmp.eq.s32.totalorder %s19, 0
  %p21 = pneg %p20
  %23 = shalt.err (%p21)

</llo_original>
